<compile_context>
chip_gen: v7x
topology: tpu7x:2x2x1
jax: 0.10.0
libtpu: 0.0.40
codegen_flags: <defaults>
</compile_context>

<pallas_src>
import math
import functools

import jax
import jax.numpy as jnp
import numpy as np
from jax.experimental import pallas as pl
from jax.experimental.pallas import tpu as pltpu


def _round_up(x, m):
    return ((x + m - 1) // m) * m


def _critic_kernel(s_ref, a_ref, g_ref,
                   w1s_ref, w1a_ref, w1g_ref, b1_ref,
                   w2_ref, b2_ref, w3_ref, b3_ref,
                   o_ref, *, q_offset, q_limit):
    f32 = jnp.float32
    bf16 = jnp.bfloat16

    # ---- layer 1: fused concat -> three partial matmuls (MXU, bf16 in / f32 acc)
    h1 = jnp.dot(s_ref[...].astype(bf16), w1s_ref[...], preferred_element_type=f32)
    h1 += jnp.dot(a_ref[...].astype(bf16), w1a_ref[...], preferred_element_type=f32)
    h1 += jnp.dot(g_ref[...].astype(bf16), w1g_ref[...], preferred_element_type=f32)
    h1 = jnp.maximum(h1 + b1_ref[...], 0.0)                         # (bt, 64) f32

    # ---- layer 2 (MXU, bf16 in / f32 acc)
    h2 = jnp.dot(h1.astype(bf16), w2_ref[...], preferred_element_type=f32)
    h2 = jnp.maximum(h2 + b2_ref[...], 0.0)                         # (bt, 64) f32

    # ---- layer 3: N=1 projection kept OFF the MXU (VPU mul + XLU lane reduce)
    q = jnp.sum(h2 * w3_ref[...], axis=-1, keepdims=True) + b3_ref[...]   # (bt, 1)

    # TODO(synk): for very large B a transposed (1, B_TILE) lane-dense store
    # would remove the masked column stores; skipped here since the output is
    # only 4 B/row (<1% of input DMA traffic) at this network width.
    o_ref[...] = jax.nn.sigmoid(q + q_offset) * q_limit             # (bt, 1)


def critic_forward(state, action, goal, params, *, q_offset, q_limit,
                   block_batch=1024):
    """state:(B,S) action:(B,A) goal:(B,G)  ->  (B,1) float32."""
    w1, b1, w2, b2, w3, b3 = params
    B, S = state.shape
    A = action.shape[1]
    G = goal.shape[1]

    state = state.astype(jnp.float32)
    action = action.astype(jnp.float32)
    goal = goal.astype(jnp.float32)

    # Pad batch to a sublane multiple (8), then to the batch tile.
    bt = min(block_batch, _round_up(B, 8))
    b_pad = _round_up(B, bt)
    if b_pad != B:
        pad = ((0, b_pad - B), (0, 0))
        state = jnp.pad(state, pad)
        action = jnp.pad(action, pad)
        goal = jnp.pad(goal, pad)

    # Pre-split the first-layer weight by input segment (fuses torch.cat into
    # the kernel) and cast MXU operands to bf16 (accumulation stays f32).
    w1 = w1.astype(jnp.float32)
    w1s = w1[:S].astype(jnp.bfloat16)
    w1a = w1[S:S + A].astype(jnp.bfloat16)
    w1g = w1[S + A:].astype(jnp.bfloat16)
    w2b = w2.astype(jnp.bfloat16)
    b1r = b1.reshape(1, -1).astype(jnp.float32)
    b2r = b2.reshape(1, -1).astype(jnp.float32)
    w3r = w3.reshape(1, -1).astype(jnp.float32)      # (1, 64) — VPU path, f32
    b3r = jnp.asarray(b3, jnp.float32).reshape(1, 1)

    kernel = functools.partial(_critic_kernel,
                               q_offset=float(q_offset),
                               q_limit=float(q_limit))

    # Batch-tiled activations; weights/biases resident (same block every step).
    x_spec = lambda d: pl.BlockSpec((bt, d), lambda i: (i, 0))
    w_spec = lambda arr: pl.BlockSpec(arr.shape, lambda i: (0,) * arr.ndim)

    out = pl.pallas_call(
        kernel,
        out_shape=jax.ShapeDtypeStruct((b_pad, 1), jnp.float32),
        grid=(b_pad // bt,),
        in_specs=[x_spec(S), x_spec(A), x_spec(G),
                  w_spec(w1s), w_spec(w1a), w_spec(w1g), w_spec(b1r),
                  w_spec(w2b), w_spec(b2r), w_spec(w3r), w_spec(b3r)],
        out_specs=pl.BlockSpec((bt, 1), lambda i: (i, 0)),
        compiler_params=pltpu.CompilerParams(
            dimension_semantics=("parallel",)),   # v7x: shard batch over 2 TCs
    )(state, action, goal, w1s, w1a, w1g, b1r, w2b, b2r, w3r, b3r)

    return out[:B]


def init_params(key, in_dim, hidden=64):
    """Deterministic synthetic init (uniform, like torch default scale)."""
    ks = jax.random.split(key, 6)

    def lin(kw, kb, fan_in, fan_out):
        bound = 1.0 / math.sqrt(fan_in)
        w = jax.random.uniform(kw, (fan_in, fan_out), jnp.float32, -bound, bound)
        b = jax.random.uniform(kb, (1, fan_out), jnp.float32, -bound, bound)
        return w, b

    w1, b1 = lin(ks[0], ks[1], in_dim, hidden)
    w2, b2 = lin(ks[2], ks[3], hidden, hidden)
    w3, b3 = lin(ks[4], ks[5], hidden, 1)
    return (w1, b1, w2, b2, w3, b3)


def reference_forward_f32(state, action, goal, params, *, q_offset, q_limit):
    """Pure-f32 reference matching the PyTorch module."""
    x = jnp.concatenate([state, action, goal], axis=1).astype(jnp.float32)
    w1, b1, w2, b2, w3, b3 = params
    h1 = jnp.maximum(x @ w1 + b1, 0.0)
    h2 = jnp.maximum(h1 @ w2 + b2, 0.0)
    q = h2 @ w3 + b3
    return jax.nn.sigmoid(q + q_offset) * q_limit


def reference_forward_matched(state, action, goal, params, *, q_offset, q_limit):
    """Pure-JAX reference mirroring the kernel numerics
    (bf16 MXU operands, f32 accumulation, split first-layer matmul)."""
    w1, b1, w2, b2, w3, b3 = params
    S = state.shape[1]
    A = action.shape[1]
    bf16, f32 = jnp.bfloat16, jnp.float32
    h1 = (jnp.dot(state.astype(bf16), w1[:S].astype(bf16), preferred_element_type=f32)
          + jnp.dot(action.astype(bf16), w1[S:S + A].astype(bf16), preferred_element_type=f32)
          + jnp.dot(goal.astype(bf16), w1[S + A:].astype(bf16), preferred_element_type=f32))
    h1 = jnp.maximum(h1 + b1, 0.0)
    h2 = jnp.dot(h1.astype(bf16), w2.astype(bf16), preferred_element_type=f32)
    h2 = jnp.maximum(h2 + b2, 0.0)
    q = jnp.sum(h2 * w3.reshape(1, -1), axis=-1, keepdims=True) + b3
    return jax.nn.sigmoid(q + q_offset) * q_limit


if __name__ == "__main__":
    # Small, forward-consistent dims (env.state_dim / action_dim / goal_dim).
    B, STATE_DIM, ACTION_DIM, GOAL_DIM = 8, 16, 4, 8
    TIME_SCALE = 10.0
    q_limit = -TIME_SCALE                      # args.time_scale -> q_limit
    q_init = -0.067
    q_offset = -np.log(q_limit / q_init - 1.0)

    key = jax.random.PRNGKey(0)
    k_s, k_a, k_g, k_p = jax.random.split(key, 4)
    state = jax.random.normal(k_s, (B, STATE_DIM), jnp.float32)
    action = jax.random.normal(k_a, (B, ACTION_DIM), jnp.float32)
    goal = jax.random.normal(k_g, (B, GOAL_DIM), jnp.float32)

    params = init_params(k_p, STATE_DIM + ACTION_DIM + GOAL_DIM)

    out = critic_forward(state, action, goal, params,
                         q_offset=q_offset, q_limit=q_limit)
    out = jax.block_until_ready(out)
    assert out.shape == (B, 1)

    # Tight check against a reference with identical (bf16-in / f32-acc) numerics.
    ref_matched = reference_forward_matched(state, action, goal, params,
                                            q_offset=q_offset, q_limit=q_limit)
    np.testing.assert_allclose(np.asarray(out), np.asarray(ref_matched),
                               rtol=1e-4, atol=1e-4)

    # Loose check against the exact f32 PyTorch-equivalent forward.
    ref_f32 = reference_forward_f32(state, action, goal, params,
                                    q_offset=q_offset, q_limit=q_limit)
    np.testing.assert_allclose(np.asarray(out), np.asarray(ref_f32),
                               rtol=2e-2, atol=2e-2)

    print("KERNEL_OK")
</pallas_src>

<mosaic_0001>
module attributes {stable_mosaic.version = 11 : i64} {
  func.func @_critic_kernel(%arg0: i32, %arg1: memref<8x16xf32, #tpu.memory_space<vmem>>, %arg2: memref<8x4xf32, #tpu.memory_space<vmem>>, %arg3: memref<8x8xf32, #tpu.memory_space<vmem>>, %arg4: memref<16x64xbf16, #tpu.memory_space<vmem>>, %arg5: memref<4x64xbf16, #tpu.memory_space<vmem>>, %arg6: memref<8x64xbf16, #tpu.memory_space<vmem>>, %arg7: memref<1x64xf32, #tpu.memory_space<vmem>>, %arg8: memref<64x64xbf16, #tpu.memory_space<vmem>>, %arg9: memref<1x64xf32, #tpu.memory_space<vmem>>, %arg10: memref<1x64xf32, #tpu.memory_space<vmem>>, %arg11: memref<1x1xf32, #tpu.memory_space<vmem>>, %arg12: memref<8x1xf32, #tpu.memory_space<vmem>>) attributes {dimension_semantics = [#tpu.dimension_semantics<parallel>], iteration_bounds = array<i64: 1>, scalar_prefetch = 0 : i64, scratch_operands = 0 : i64, tpu.core_type = #tpu.core_type<tc>, window_params = [{transform_indices = @transform_0, window_bounds = array<i64: 8, 16>}, {transform_indices = @transform_1, window_bounds = array<i64: 8, 4>}, {transform_indices = @transform_2, window_bounds = array<i64: 8, 8>}, {pipeline_mode = #tpu.pipeline_mode<synchronous>, transform_indices = @transform_3, window_bounds = array<i64: 16, 64>}, {pipeline_mode = #tpu.pipeline_mode<synchronous>, transform_indices = @transform_4, window_bounds = array<i64: 4, 64>}, {pipeline_mode = #tpu.pipeline_mode<synchronous>, transform_indices = @transform_5, window_bounds = array<i64: 8, 64>}, {pipeline_mode = #tpu.pipeline_mode<synchronous>, transform_indices = @transform_6, window_bounds = array<i64: 1, 64>}, {pipeline_mode = #tpu.pipeline_mode<synchronous>, transform_indices = @transform_7, window_bounds = array<i64: 64, 64>}, {pipeline_mode = #tpu.pipeline_mode<synchronous>, transform_indices = @transform_8, window_bounds = array<i64: 1, 64>}, {pipeline_mode = #tpu.pipeline_mode<synchronous>, transform_indices = @transform_9, window_bounds = array<i64: 1, 64>}, {pipeline_mode = #tpu.pipeline_mode<synchronous>, transform_indices = @transform_10, window_bounds = array<i64: 1, 1>}, {transform_indices = @transform_11, window_bounds = array<i64: 8, 1>}]} {
    %c0 = arith.constant 0 : index
    %c0_0 = arith.constant 0 : index
    %0 = vector.load %arg1[%c0, %c0_0] : memref<8x16xf32, #tpu.memory_space<vmem>>, vector<8x16xf32>
    %1 = arith.truncf %0 : vector<8x16xf32> to vector<8x16xbf16>
    %c0_1 = arith.constant 0 : index
    %c0_2 = arith.constant 0 : index
    %2 = vector.load %arg4[%c0_1, %c0_2] : memref<16x64xbf16, #tpu.memory_space<vmem>>, vector<16x64xbf16>
    %cst = arith.constant dense<0.000000e+00> : vector<8x64xf32>
    %3 = tpu.matmul %1, %2, %cst {dimension_numbers = #tpu.dot_dimension_numbers<[1], [0], [0], [1], [0, 0, 1, 1], [], []>} : vector<8x16xbf16>, vector<16x64xbf16>, vector<8x64xf32> -> vector<8x64xf32>
    %c0_3 = arith.constant 0 : index
    %c0_4 = arith.constant 0 : index
    %4 = vector.load %arg2[%c0_3, %c0_4] : memref<8x4xf32, #tpu.memory_space<vmem>>, vector<8x4xf32>
    %5 = arith.truncf %4 : vector<8x4xf32> to vector<8x4xbf16>
    %c0_5 = arith.constant 0 : index
    %c0_6 = arith.constant 0 : index
    %6 = vector.load %arg5[%c0_5, %c0_6] : memref<4x64xbf16, #tpu.memory_space<vmem>>, vector<4x64xbf16>
    %cst_7 = arith.constant dense<0.000000e+00> : vector<8x64xf32>
    %7 = tpu.matmul %5, %6, %cst_7 {dimension_numbers = #tpu.dot_dimension_numbers<[1], [0], [0], [1], [0, 0, 1, 1], [], []>} : vector<8x4xbf16>, vector<4x64xbf16>, vector<8x64xf32> -> vector<8x64xf32>
    %8 = arith.addf %3, %7 : vector<8x64xf32>
    %c0_8 = arith.constant 0 : index
    %c0_9 = arith.constant 0 : index
    %9 = vector.load %arg3[%c0_8, %c0_9] : memref<8x8xf32, #tpu.memory_space<vmem>>, vector<8x8xf32>
    %10 = arith.truncf %9 : vector<8x8xf32> to vector<8x8xbf16>
    %c0_10 = arith.constant 0 : index
    %c0_11 = arith.constant 0 : index
    %11 = vector.load %arg6[%c0_10, %c0_11] : memref<8x64xbf16, #tpu.memory_space<vmem>>, vector<8x64xbf16>
    %cst_12 = arith.constant dense<0.000000e+00> : vector<8x64xf32>
    %12 = tpu.matmul %10, %11, %cst_12 {dimension_numbers = #tpu.dot_dimension_numbers<[1], [0], [0], [1], [0, 0, 1, 1], [], []>} : vector<8x8xbf16>, vector<8x64xbf16>, vector<8x64xf32> -> vector<8x64xf32>
    %13 = arith.addf %8, %12 : vector<8x64xf32>
    %c0_13 = arith.constant 0 : index
    %c0_14 = arith.constant 0 : index
    %14 = vector.load %arg7[%c0_13, %c0_14] : memref<1x64xf32, #tpu.memory_space<vmem>>, vector<1x64xf32>
    %15 = vector.broadcast %14 : vector<1x64xf32> to vector<8x64xf32>
    %16 = arith.addf %13, %15 : vector<8x64xf32>
    %cst_15 = arith.constant 0.000000e+00 : f32
    %17 = vector.broadcast %cst_15 : f32 to vector<8x64xf32>
    %18 = arith.maximumf %16, %17 : vector<8x64xf32>
    %19 = arith.truncf %18 : vector<8x64xf32> to vector<8x64xbf16>
    %c0_16 = arith.constant 0 : index
    %c0_17 = arith.constant 0 : index
    %20 = vector.load %arg8[%c0_16, %c0_17] : memref<64x64xbf16, #tpu.memory_space<vmem>>, vector<64x64xbf16>
    %cst_18 = arith.constant dense<0.000000e+00> : vector<8x64xf32>
    %21 = tpu.matmul %19, %20, %cst_18 {dimension_numbers = #tpu.dot_dimension_numbers<[1], [0], [0], [1], [0, 0, 1, 1], [], []>} : vector<8x64xbf16>, vector<64x64xbf16>, vector<8x64xf32> -> vector<8x64xf32>
    %c0_19 = arith.constant 0 : index
    %c0_20 = arith.constant 0 : index
    %22 = vector.load %arg9[%c0_19, %c0_20] : memref<1x64xf32, #tpu.memory_space<vmem>>, vector<1x64xf32>
    %23 = vector.broadcast %22 : vector<1x64xf32> to vector<8x64xf32>
    %24 = arith.addf %21, %23 : vector<8x64xf32>
    %cst_21 = arith.constant 0.000000e+00 : f32
    %25 = vector.broadcast %cst_21 : f32 to vector<8x64xf32>
    %26 = arith.maximumf %24, %25 : vector<8x64xf32>
    %c0_22 = arith.constant 0 : index
    %c0_23 = arith.constant 0 : index
    %27 = vector.load %arg10[%c0_22, %c0_23] : memref<1x64xf32, #tpu.memory_space<vmem>>, vector<1x64xf32>
    %28 = vector.broadcast %27 : vector<1x64xf32> to vector<8x64xf32>
    %29 = arith.mulf %26, %28 : vector<8x64xf32>
    %cst_24 = arith.constant dense<0.000000e+00> : vector<8xf32>
    %30 = vector.multi_reduction <add>, %29, %cst_24 [1] : vector<8x64xf32> to vector<8xf32>
    %31 = vector.shape_cast %30 : vector<8xf32> to vector<8x1xf32>
    %c0_25 = arith.constant 0 : index
    %c0_26 = arith.constant 0 : index
    %32 = vector.load %arg11[%c0_25, %c0_26] : memref<1x1xf32, #tpu.memory_space<vmem>>, vector<1x1xf32>
    %33 = vector.broadcast %32 : vector<1x1xf32> to vector<8x1xf32>
    %34 = arith.addf %31, %33 : vector<8x1xf32>
    %cst_27 = arith.constant -4.99892521 : f32
    %35 = vector.broadcast %cst_27 : f32 to vector<8x1xf32>
    %36 = arith.addf %34, %35 : vector<8x1xf32>
    %37 = arith.negf %36 : vector<8x1xf32>
    %38 = math.exp %37 : vector<8x1xf32>
    %cst_28 = arith.constant 1.000000e+00 : f32
    %39 = vector.broadcast %cst_28 : f32 to vector<8x1xf32>
    %40 = arith.addf %39, %38 : vector<8x1xf32>
    %41 = arith.divf %39, %40 : vector<8x1xf32>
    %cst_29 = arith.constant -1.000000e+01 : f32
    %42 = vector.broadcast %cst_29 : f32 to vector<8x1xf32>
    %43 = arith.mulf %41, %42 : vector<8x1xf32>
    %c0_30 = arith.constant 0 : index
    %c0_31 = arith.constant 0 : index
    %44 = vector.load %arg12[%c0_30, %c0_31] : memref<8x1xf32, #tpu.memory_space<vmem>>, vector<8x1xf32>
    tpu.vector_store %arg12[%c0_30, %c0_31], %43 {strides = array<i32>} : memref<8x1xf32, #tpu.memory_space<vmem>>, vector<8x1xf32>,
    return
  }
  func.func @transform_0(%arg0: i32) -> (i32, i32) {
    %c0_i32 = arith.constant 0 : i32
    %c0_i32_0 = arith.constant 0 : i32
    return %arg0, %c0_i32 : i32, i32
  }
  func.func @transform_1(%arg0: i32) -> (i32, i32) {
    %c0_i32 = arith.constant 0 : i32
    %c0_i32_0 = arith.constant 0 : i32
    return %arg0, %c0_i32 : i32, i32
  }
  func.func @transform_2(%arg0: i32) -> (i32, i32) {
    %c0_i32 = arith.constant 0 : i32
    %c0_i32_0 = arith.constant 0 : i32
    return %arg0, %c0_i32 : i32, i32
  }
  func.func @transform_3(%arg0: i32) -> (i32, i32) {
    %c0_i32 = arith.constant 0 : i32
    %c0_i32_0 = arith.constant 0 : i32
    %c0_i32_1 = arith.constant 0 : i32
    return %c0_i32, %c0_i32_0 : i32, i32
  }
  func.func @transform_4(%arg0: i32) -> (i32, i32) {
    %c0_i32 = arith.constant 0 : i32
    %c0_i32_0 = arith.constant 0 : i32
    %c0_i32_1 = arith.constant 0 : i32
    return %c0_i32, %c0_i32_0 : i32, i32
  }
  func.func @transform_5(%arg0: i32) -> (i32, i32) {
    %c0_i32 = arith.constant 0 : i32
    %c0_i32_0 = arith.constant 0 : i32
    %c0_i32_1 = arith.constant 0 : i32
    return %c0_i32, %c0_i32_0 : i32, i32
  }
  func.func @transform_6(%arg0: i32) -> (i32, i32) {
    %c0_i32 = arith.constant 0 : i32
    %c0_i32_0 = arith.constant 0 : i32
    %c0_i32_1 = arith.constant 0 : i32
    return %c0_i32, %c0_i32_0 : i32, i32
  }
  func.func @transform_7(%arg0: i32) -> (i32, i32) {
    %c0_i32 = arith.constant 0 : i32
    %c0_i32_0 = arith.constant 0 : i32
    %c0_i32_1 = arith.constant 0 : i32
    return %c0_i32, %c0_i32_0 : i32, i32
  }
  func.func @transform_8(%arg0: i32) -> (i32, i32) {
    %c0_i32 = arith.constant 0 : i32
    %c0_i32_0 = arith.constant 0 : i32
    %c0_i32_1 = arith.constant 0 : i32
    return %c0_i32, %c0_i32_0 : i32, i32
  }
  func.func @transform_9(%arg0: i32) -> (i32, i32) {
    %c0_i32 = arith.constant 0 : i32
    %c0_i32_0 = arith.constant 0 : i32
    %c0_i32_1 = arith.constant 0 : i32
    return %c0_i32, %c0_i32_0 : i32, i32
  }
  func.func @transform_10(%arg0: i32) -> (i32, i32) {
    %c0_i32 = arith.constant 0 : i32
    %c0_i32_0 = arith.constant 0 : i32
    %c0_i32_1 = arith.constant 0 : i32
    return %c0_i32, %c0_i32_0 : i32, i32
  }
  func.func @transform_11(%arg0: i32) -> (i32, i32) {
    %c0_i32 = arith.constant 0 : i32
    %c0_i32_0 = arith.constant 0 : i32
    return %arg0, %c0_i32 : i32, i32
  }
}

</mosaic_0001>

<llo_original>
// kernel: tpu_custom_call.1
$region0: #{tpu_custom_call.1}
  #allocation0 [shape = 'u32[]', space=smem, size = 0x4, offset = 0x4, fixed_abs, tag = 'smem constant byte address 0x4 - core index']
  #allocation1 [shape = 'u32[144,128]{1,0:T(1,128)}', space=vmem, size = 0x12000, scoped, tag = 'internal scratch']
  #allocation2 [shape = 'f32[1,1]{1,0:T(1,128)S(1)}', space=vmem, size = 0x200, scoped, tag = 'scoped memory for tpu_custom_call.1']
  %s0 = inlined_call_operand.vmem [shape: f32[8,16], index: 0, kind: input, shape index: {}]
  %s1 = inlined_call_operand.vmem [shape: f32[8,4], index: 1, kind: input, shape index: {}]
  %s2 = inlined_call_operand.hbm [shape: f32[8,8], index: 2, kind: input, shape index: {}]
  %s3 = inlined_call_operand.hbm [shape: bf16[16,64], index: 3, kind: input, shape index: {}]
  %s4 = inlined_call_operand.vmem [shape: bf16[4,64], index: 4, kind: input, shape index: {}]
  %s5 = inlined_call_operand.hbm [shape: bf16[8,64], index: 5, kind: input, shape index: {}]
  %s6 = inlined_call_operand.hbm [shape: f32[1,64], index: 6, kind: input, shape index: {}]
  %s7 = inlined_call_operand.vmem [shape: bf16[64,64], index: 7, kind: input, shape index: {}]
  %s8 = inlined_call_operand.vmem [shape: f32[1,64], index: 8, kind: input, shape index: {}]
  %s9 = inlined_call_operand.vmem [shape: f32[1,64], index: 9, kind: input, shape index: {}]
  %s10 = inlined_call_operand.<no memory space> [shape: f32[1,1], index: 10, kind: input, shape index: {}]
  %s11 = inlined_call_operand.vmem [shape: f32[8,1], index: 11, kind: output, shape index: {}]
  %s12 = sld [smem:[#allocation0]]
  $region70: #{tpu_custom_call.1} parent=0
    _
  %s14 = ssub.s32 1, %s12
  %s15 = scalar_select 0, %s14, %s12
  %v16 = vstv %s10
  %17 = vst [vmem:[#allocation2] sm:$0x1] %v16
  $region1: #{tpu_custom_call.1} parent=0
    #allocation3 [shape = 'u8[4096]{0}', space=vmem, size = 0x1000, scoped, tag = 'input window, operand 2, single buffered']
    #allocation4 [shape = 's32[1]{0}', space=sflag, size = 0x4, scoped, tag = 'scoped memory for tpu_custom_call.1']
    #allocation5 [shape = 'u8[4096]{0}', space=vmem, size = 0x1000, scoped, tag = 'input window, operand 3, single buffered']
    #allocation6 [shape = 's32[1]{0}', space=sflag, size = 0x4, scoped, tag = 'scoped memory for tpu_custom_call.1']
    #allocation7 [shape = 'u8[2048]{0}', space=vmem, size = 0x800, scoped, tag = 'input window, operand 5, single buffered']
    #allocation8 [shape = 'u8[512]{0}', space=vmem, size = 0x400, scoped, tag = 'input window, operand 6, single buffered']
    #allocation9 [shape = 's32[1]{0}', space=sflag, size = 0x4, scoped, tag = 'scoped memory for tpu_custom_call.1']
    %18 = vsyncpa [#allocation4], 0
    %19 = vsyncpa [#allocation6], 0
    %20 = vsyncpa [#allocation9], 0
    // Predicated region
    $region2: #{tpu_custom_call.1} parent=1 // pred_check
      _
    $region3: #{tpu_custom_call.1} parent=1 // pred_check_branch
      %22 = sbr.rel (0) target = $region5
    $region4: #{tpu_custom_call.1} parent=1 // pred_region
      _
    $region5: #{tpu_custom_call.1} parent=1 // pred_fallthru
      _
    // Predicated region
    $region6: #{tpu_custom_call.1} parent=1 // pred_check
      _
    $region7: #{tpu_custom_call.1} parent=1 // pred_check_branch
      %24 = sbr.rel (0) target = $region9
    $region8: #{tpu_custom_call.1} parent=1 // pred_region
      _
    $region9: #{tpu_custom_call.1} parent=1 // pred_fallthru
      _
    // Predicated region
    $region10: #{tpu_custom_call.1} parent=1 // pred_check
      _
    $region11: #{tpu_custom_call.1} parent=1 // pred_check_branch
      %26 = sbr.rel (0) target = $region13
    $region12: #{tpu_custom_call.1} parent=1 // pred_region
      %s28 = ssub.s32 128, 128
      %29 = vsyncadd [#allocation4], %s28
      %s31 = sshll.u32 [#allocation3], 4
      %s32 = int_to_ptr.vmem [resolvable:$true] %s31
      %34 = dma.hbm_to_vmem [thread:$0]  %s2, 128, %s32, [#allocation4]
    $region13: #{tpu_custom_call.1} parent=1 // pred_fallthru
      _
    // Predicated region
    $region14: #{tpu_custom_call.1} parent=1 // pred_check
      _
    $region15: #{tpu_custom_call.1} parent=1 // pred_check_branch
      %36 = sbr.rel (0) target = $region17
    $region16: #{tpu_custom_call.1} parent=1 // pred_region
      %s38 = ssub.s32 128, 128
      %39 = vsyncadd [#allocation6], %s38
      %s40 = sshll.u32 [#allocation5], 4
      %s41 = int_to_ptr.vmem [resolvable:$true] %s40
      %46 = dma.hbm_to_vmem [thread:$0]  %s3, 128, %s41, [#allocation6], 64, 64, 4
    $region17: #{tpu_custom_call.1} parent=1 // pred_fallthru
      _
    // Predicated region
    $region18: #{tpu_custom_call.1} parent=1 // pred_check
      _
    $region19: #{tpu_custom_call.1} parent=1 // pred_check_branch
      %48 = sbr.rel (0) target = $region21
    $region20: #{tpu_custom_call.1} parent=1 // pred_region
      _
    $region21: #{tpu_custom_call.1} parent=1 // pred_fallthru
      _
    // Predicated region
    $region22: #{tpu_custom_call.1} parent=1 // pred_check
      _
    $region23: #{tpu_custom_call.1} parent=1 // pred_check_branch
      %50 = sbr.rel (0) target = $region25
    $region24: #{tpu_custom_call.1} parent=1 // pred_region
      %s52 = ssub.s32 64, 64
      %53 = vsyncadd [#allocation6], %s52
      %s55 = sshll.u32 [#allocation7], 4
      %s56 = int_to_ptr.vmem [resolvable:$true] %s55
      %58 = dma.hbm_to_vmem [thread:$0]  %s5, 64, %s56, [#allocation6]
    $region25: #{tpu_custom_call.1} parent=1 // pred_fallthru
      _
    // Predicated region
    $region26: #{tpu_custom_call.1} parent=1 // pred_check
      _
    $region27: #{tpu_custom_call.1} parent=1 // pred_check_branch
      %60 = sbr.rel (0) target = $region29
    $region28: #{tpu_custom_call.1} parent=1 // pred_region
      %s62 = ssub.s32 16, 16
      %63 = vsyncadd [#allocation9], %s62
      %s65 = sshll.u32 [#allocation8], 4
      %s66 = int_to_ptr.vmem [resolvable:$true] %s65
      %68 = dma.hbm_to_vmem [thread:$0]  %s6, 16, %s66, [#allocation9]
    $region29: #{tpu_custom_call.1} parent=1 // pred_fallthru
      _
    // Predicated region
    $region30: #{tpu_custom_call.1} parent=1 // pred_check
      _
    $region31: #{tpu_custom_call.1} parent=1 // pred_check_branch
      %70 = sbr.rel (0) target = $region33
    $region32: #{tpu_custom_call.1} parent=1 // pred_region
      _
    $region33: #{tpu_custom_call.1} parent=1 // pred_fallthru
      _
    // Predicated region
    $region34: #{tpu_custom_call.1} parent=1 // pred_check
      _
    $region35: #{tpu_custom_call.1} parent=1 // pred_check_branch
      %72 = sbr.rel (0) target = $region37
    $region36: #{tpu_custom_call.1} parent=1 // pred_region
      _
    $region37: #{tpu_custom_call.1} parent=1 // pred_fallthru
      _
    // Predicated region
    $region38: #{tpu_custom_call.1} parent=1 // pred_check
      _
    $region39: #{tpu_custom_call.1} parent=1 // pred_check_branch
      %74 = sbr.rel (0) target = $region41
    $region40: #{tpu_custom_call.1} parent=1 // pred_region
      _
    $region41: #{tpu_custom_call.1} parent=1 // pred_fallthru
      _
    // Predicated region
    $region42: #{tpu_custom_call.1} parent=1 // pred_check
      _
    $region43: #{tpu_custom_call.1} parent=1 // pred_check_branch
      %76 = sbr.rel (0) target = $region45
    $region44: #{tpu_custom_call.1} parent=1 // pred_region
      _
    $region45: #{tpu_custom_call.1} parent=1 // pred_fallthru
      _
    // Predicated region
    $region46: #{tpu_custom_call.1} parent=1 // pred_check
      _
    $region47: #{tpu_custom_call.1} parent=1 // pred_check_branch
      %78 = sbr.rel (0) target = $region49
    $region48: #{tpu_custom_call.1} parent=1 // pred_region
      %79 = dma.done [#allocation4], 128
    $region49: #{tpu_custom_call.1} parent=1 // pred_fallthru
      _
    // Predicated region
    $region50: #{tpu_custom_call.1} parent=1 // pred_check
      _
    $region51: #{tpu_custom_call.1} parent=1 // pred_check_branch
      %81 = sbr.rel (0) target = $region53
    $region52: #{tpu_custom_call.1} parent=1 // pred_region
      %82 = dma.done [#allocation6], 128
    $region53: #{tpu_custom_call.1} parent=1 // pred_fallthru
      _
    // Predicated region
    $region54: #{tpu_custom_call.1} parent=1 // pred_check
      _
    $region55: #{tpu_custom_call.1} parent=1 // pred_check_branch
      %84 = sbr.rel (0) target = $region57
    $region56: #{tpu_custom_call.1} parent=1 // pred_region
      %85 = dma.done [#allocation6], 64
    $region57: #{tpu_custom_call.1} parent=1 // pred_fallthru
      _
    // Predicated region
    $region58: #{tpu_custom_call.1} parent=1 // pred_check
      _
    $region59: #{tpu_custom_call.1} parent=1 // pred_check_branch
      %87 = sbr.rel (0) target = $region61
    $region60: #{tpu_custom_call.1} parent=1 // pred_region
      %88 = dma.done [#allocation9], 16
    $region61: #{tpu_custom_call.1} parent=1 // pred_fallthru
      _
    %v90 = vld [vmem:[%s0] sm:$0xff]
    %v91 = vpack.c.bf16 %v90, %v90
    %v92 = vld [vmem:[#allocation5] sm:$0xf]
    %v93 = vld [vmem:[#allocation5 + $0x4] sm:$0xf]
    %v94 = vld [vmem:[%s1] sm:$0xff]
    %v95 = vpack.c.bf16 %v94, %v94
    %v96 = vld [vmem:[%s4] sm:$0x3]
    %vm97 = vcmask 31744
    %v99 = vsel %vm97, %v95, 0
    %vm101 = vcmask 1041408
    %v103 = vsel %vm101, %v96, 0
    %105 = vmatprep.subr.bf16.mxu0 0
    %106 = vmatpush1.bf16.msra.mxu0 %v103
    %107 = vmatprep.subr.bf16.mxu0 0
    %108 = vmatpush1.bf16.msra.mxu0 0
    %109 = vmatprep.subr.bf16.mxu0 0
    %110 = vmatpush1.bf16.msra.mxu0 0
    %111 = vmatprep.subr.bf16.mxu0 0
    %112 = vmatpush1.bf16.msra.mxu0 0
    %113 = vmatprep.subr.bf16.mxu0 0
    %114 = vmatpush1.bf16.msra.mxu0 0
    %115 = vmatprep.subr.bf16.mxu0 0
    %116 = vmatpush1.bf16.msra.mxu0 0
    %117 = vmatprep.subr.bf16.mxu0 0
    %118 = vmatpush1.bf16.msra.mxu0 0
    %119 = vmatprep.subr.bf16.mxu0 0
    %120 = vmatpush1.bf16.msra.mxu0 0
    %121 = vmatprep.subr.bf16.mxu0 0
    %122 = vmatpush1.bf16.msra.mxu0 0
    %123 = vmatprep.subr.bf16.mxu0 0
    %124 = vmatpush1.bf16.msra.mxu0 0
    %125 = vmatprep.subr.bf16.mxu0 0
    %126 = vmatpush1.bf16.msra.mxu0 0
    %127 = vmatprep.subr.bf16.mxu0 0
    %128 = vmatpush1.bf16.msra.mxu0 0
    %129 = vmatprep.subr.bf16.mxu0 0
    %130 = vmatpush1.bf16.msra.mxu0 0
    %131 = vmatprep.subr.bf16.mxu0 0
    %132 = vmatpush1.bf16.msra.mxu0 0
    %133 = vmatprep.subr.bf16.mxu0 0
    %134 = vmatpush1.bf16.msra.mxu0 0
    %135 = vmatprep.subr.bf16.mxu0 0
    %136 = vmatpush1.bf16.msra.mxu0 0
    %137 = vmatprep.mubr.bf16.mxu0 0
    %138 = vmatmul.mubr.bf16.gmra.mrb[0].mxu0 %v99
    %v139 = vpop.f32.mrb[0].mxu0
    %v140 = vadd.f32 0.0, %v139
    %v141 = vpop.f32.mrb[0].mxu0
    %v142 = vpop.f32.mrb[0].mxu0
    %v143 = vpop.f32.mrb[0].mxu0
    %144 = vdwg.mxu0
    %v147 = vunpack.c.l.b16 %v92
    %v148 = vunpack.c.l.b16 %v93
    %v149 = vpack.c.b16 %v148, %v147
    %vm151 = vcmask 130048
    %v153 = vsel %vm151, %v91, 0
    %155 = vmatprep.subr.bf16.mxu0 0
    %156 = vmatpush1.bf16.msra.mxu0 %v149
    %157 = vmatprep.subr.bf16.mxu0 0
    %158 = vmatpush1.bf16.msra.mxu0 0
    %159 = vmatprep.subr.bf16.mxu0 0
    %160 = vmatpush1.bf16.msra.mxu0 0
    %161 = vmatprep.subr.bf16.mxu0 0
    %162 = vmatpush1.bf16.msra.mxu0 0
    %163 = vmatprep.subr.bf16.mxu0 0
    %164 = vmatpush1.bf16.msra.mxu0 0
    %165 = vmatprep.subr.bf16.mxu0 0
    %166 = vmatpush1.bf16.msra.mxu0 0
    %167 = vmatprep.subr.bf16.mxu0 0
    %168 = vmatpush1.bf16.msra.mxu0 0
    %169 = vmatprep.subr.bf16.mxu0 0
    %170 = vmatpush1.bf16.msra.mxu0 0
    %171 = vmatprep.subr.bf16.mxu0 0
    %172 = vmatpush1.bf16.msra.mxu0 0
    %173 = vmatprep.subr.bf16.mxu0 0
    %174 = vmatpush1.bf16.msra.mxu0 0
    %175 = vmatprep.subr.bf16.mxu0 0
    %176 = vmatpush1.bf16.msra.mxu0 0
    %177 = vmatprep.subr.bf16.mxu0 0
    %178 = vmatpush1.bf16.msra.mxu0 0
    %179 = vmatprep.subr.bf16.mxu0 0
    %180 = vmatpush1.bf16.msra.mxu0 0
    %181 = vmatprep.subr.bf16.mxu0 0
    %182 = vmatpush1.bf16.msra.mxu0 0
    %183 = vmatprep.subr.bf16.mxu0 0
    %184 = vmatpush1.bf16.msra.mxu0 0
    %185 = vmatprep.subr.bf16.mxu0 0
    %186 = vmatpush1.bf16.msra.mxu0 0
    %187 = vmatprep.mubr.bf16.mxu0 0
    %188 = vmatmul.mubr.bf16.gmra.mrb[0].mxu0 %v153
    %v189 = vpop.f32.mrb[0].mxu0
    %v190 = vadd.f32 %v140, %v189
    %v191 = vpop.f32.mrb[0].mxu0
    %v192 = vpop.f32.mrb[0].mxu0
    %v193 = vpop.f32.mrb[0].mxu0
    %194 = vdwg.mxu0
    %v195 = vld [vmem:[#allocation3] sm:$0xff]
    %v196 = vpack.c.bf16 %v195, %v195
    %v197 = vld [vmem:[#allocation7] sm:$0xf]
    %vm198 = vcmask 64512
    %v200 = vsel %vm198, %v196, 0
    %vm202 = vcmask 1043456
    %v204 = vsel %vm202, %v197, 0
    %206 = vmatprep.subr.bf16.mxu0 0
    %207 = vmatpush1.bf16.msra.mxu0 %v204
    %208 = vmatprep.subr.bf16.mxu0 0
    %209 = vmatpush1.bf16.msra.mxu0 0
    %210 = vmatprep.subr.bf16.mxu0 0
    %211 = vmatpush1.bf16.msra.mxu0 0
    %212 = vmatprep.subr.bf16.mxu0 0
    %213 = vmatpush1.bf16.msra.mxu0 0
    %214 = vmatprep.subr.bf16.mxu0 0
    %215 = vmatpush1.bf16.msra.mxu0 0
    %216 = vmatprep.subr.bf16.mxu0 0
    %217 = vmatpush1.bf16.msra.mxu0 0
    %218 = vmatprep.subr.bf16.mxu0 0
    %219 = vmatpush1.bf16.msra.mxu0 0
    %220 = vmatprep.subr.bf16.mxu0 0
    %221 = vmatpush1.bf16.msra.mxu0 0
    %222 = vmatprep.subr.bf16.mxu0 0
    %223 = vmatpush1.bf16.msra.mxu0 0
    %224 = vmatprep.subr.bf16.mxu0 0
    %225 = vmatpush1.bf16.msra.mxu0 0
    %226 = vmatprep.subr.bf16.mxu0 0
    %227 = vmatpush1.bf16.msra.mxu0 0
    %228 = vmatprep.subr.bf16.mxu0 0
    %229 = vmatpush1.bf16.msra.mxu0 0
    %230 = vmatprep.subr.bf16.mxu0 0
    %231 = vmatpush1.bf16.msra.mxu0 0
    %232 = vmatprep.subr.bf16.mxu0 0
    %233 = vmatpush1.bf16.msra.mxu0 0
    %234 = vmatprep.subr.bf16.mxu0 0
    %235 = vmatpush1.bf16.msra.mxu0 0
    %236 = vmatprep.subr.bf16.mxu0 0
    %237 = vmatpush1.bf16.msra.mxu0 0
    %238 = vmatprep.mubr.bf16.mxu0 0
    %239 = vmatmul.mubr.bf16.gmra.mrb[0].mxu0 %v200
    %v240 = vpop.f32.mrb[0].mxu0
    %v241 = vadd.f32 0.0, %v240
    %v242 = vpop.f32.mrb[0].mxu0
    %v243 = vpop.f32.mrb[0].mxu0
    %v244 = vpop.f32.mrb[0].mxu0
    %245 = vdwg.mxu0
    %v246 = vadd.f32 %v190, %v241
    %v247 = vld [vmem:[#allocation8] sm:$0x1]
    %v249 = vlaneseq
    %v250 = vshrl.u32 %v249, 7
    %v251 = vsub.s32 0, %v250
    %v252 = vrot.slane %v247, %v251
    %v254 = vadd.f32 %v246, %v252
    %v255 = vmax.f32 %v254, 0.0
    %v256 = vpack.c.bf16 %v255, %v255
    %v257 = vld [vmem:[%s7] sm:$0xf]
    %v258 = vld [vmem:[%s7 + $0x4] sm:$0xf]
    %v259 = vld [vmem:[%s7 + $0x8] sm:$0xf]
    %v260 = vld [vmem:[%s7 + $0xc] sm:$0xf]
    %v261 = vld [vmem:[%s7 + $0x10] sm:$0xf]
    %v262 = vld [vmem:[%s7 + $0x14] sm:$0xf]
    %v263 = vld [vmem:[%s7 + $0x18] sm:$0xf]
    %v264 = vld [vmem:[%s7 + $0x1c] sm:$0xf]
    %v265 = vld [vmem:[%s8] sm:$0x1]
    %v267 = vlaneseq
    %v268 = vshrl.u32 %v267, 7
    %v269 = vsub.s32 0, %v268
    %v270 = vrot.slane %v265, %v269
    %v280 = vunpack.c.l.b16 %v257
    %v281 = vunpack.c.l.b16 %v258
    %v282 = vunpack.c.l.b16 %v259
    %v283 = vunpack.c.l.b16 %v260
    %v284 = vunpack.c.l.b16 %v261
    %v285 = vunpack.c.l.b16 %v262
    %v286 = vunpack.c.l.b16 %v263
    %v287 = vunpack.c.l.b16 %v264
    %v288 = vpack.c.b16 %v281, %v280
    %v289 = vpack.c.b16 %v283, %v282
    %v290 = vpack.c.b16 %v285, %v284
    %v291 = vpack.c.b16 %v287, %v286
    %vm296 = vcmask 523264
    %v298 = vsel %vm296, %v256, 0
    %300 = vmatprep.subr.bf16.mxu0 0
    %301 = vmatpush1.bf16.msra.mxu0 %v288
    %302 = vmatprep.subr.bf16.mxu0 0
    %303 = vmatpush1.bf16.msra.mxu0 %v289
    %304 = vmatprep.subr.bf16.mxu0 0
    %305 = vmatpush1.bf16.msra.mxu0 %v290
    %306 = vmatprep.subr.bf16.mxu0 0
    %307 = vmatpush1.bf16.msra.mxu0 %v291
    %308 = vmatprep.subr.bf16.mxu0 0
    %309 = vmatpush1.bf16.msra.mxu0 0
    %310 = vmatprep.subr.bf16.mxu0 0
    %311 = vmatpush1.bf16.msra.mxu0 0
    %312 = vmatprep.subr.bf16.mxu0 0
    %313 = vmatpush1.bf16.msra.mxu0 0
    %314 = vmatprep.subr.bf16.mxu0 0
    %315 = vmatpush1.bf16.msra.mxu0 0
    %316 = vmatprep.subr.bf16.mxu0 0
    %317 = vmatpush1.bf16.msra.mxu0 0
    %318 = vmatprep.subr.bf16.mxu0 0
    %319 = vmatpush1.bf16.msra.mxu0 0
    %320 = vmatprep.subr.bf16.mxu0 0
    %321 = vmatpush1.bf16.msra.mxu0 0
    %322 = vmatprep.subr.bf16.mxu0 0
    %323 = vmatpush1.bf16.msra.mxu0 0
    %324 = vmatprep.subr.bf16.mxu0 0
    %325 = vmatpush1.bf16.msra.mxu0 0
    %326 = vmatprep.subr.bf16.mxu0 0
    %327 = vmatpush1.bf16.msra.mxu0 0
    %328 = vmatprep.subr.bf16.mxu0 0
    %329 = vmatpush1.bf16.msra.mxu0 0
    %330 = vmatprep.subr.bf16.mxu0 0
    %331 = vmatpush1.bf16.msra.mxu0 0
    %332 = vmatprep.mubr.bf16.mxu0 0
    %333 = vmatmul.mubr.bf16.gmra.mrb[0].mxu0 %v298
    %v334 = vpop.f32.mrb[0].mxu0
    %v335 = vadd.f32 %v270, %v334
    %v336 = vpop.f32.mrb[0].mxu0
    %v337 = vpop.f32.mrb[0].mxu0
    %v338 = vpop.f32.mrb[0].mxu0
    %339 = vdwg.mxu0
    %v340 = vmax.f32 %v335, 0.0
    %v341 = vld [vmem:[%s9] sm:$0x1]
    %v343 = vlaneseq
    %v344 = vshrl.u32 %v343, 7
    %v345 = vsub.s32 0, %v344
    %v346 = vrot.slane %v341, %v345
    %v348 = vmul.f32 %v340, %v346
    %v349 = vsel %vm296, %v348, 0.0
    %350 = vadd.xlane.f32.xlu0 %v349
    %v351 = vpop.xlane.xlu0 %350
    %v352 = vld [vmem:[#allocation2] sm:$0x1]
    %v354 = vlaneseq
    %v355 = vshrl.u32 %v354, 7
    %v356 = vsub.s32 0, %v355
    %v357 = vrot.slane %v352, %v356
    %v359 = vadd.f32 %v351, %v357
    %v360 = vadd.f32 %v359, -4.998925
    %v361 = vxor.u32 %v360, 2147483648
    %v362 = vmul.f32 %v361, 1.442695
    %v363 = vpow.pop %v362
    %v364 = vadd.f32 %v363, 1.0
    %v365 = vrcp.pop %v364
    %v366 = vmul.f32 1.0, %v365
    %v367 = vmul.f32 %v366, -10.0
    %vm368 = vcmask 7168
    %369 = vst.msk [vmem:[%s11] sm:$0xff] %vm368, %v367
    // Predicated region
    $region62: #{tpu_custom_call.1} parent=1 // pred_check
      _
    $region63: #{tpu_custom_call.1} parent=1 // pred_check_branch
      %371 = sbr.rel (0) target = $region65
    $region64: #{tpu_custom_call.1} parent=1 // pred_region
      _
    $region65: #{tpu_custom_call.1} parent=1 // pred_fallthru
      _
    // Predicated region
    $region66: #{tpu_custom_call.1} parent=1 // pred_check
      _
    $region67: #{tpu_custom_call.1} parent=1 // pred_check_branch
      %373 = sbr.rel (0) target = $region69
    $region68: #{tpu_custom_call.1} parent=1 // pred_region
      _
    $region69: #{tpu_custom_call.1} parent=1 // pred_fallthru
      _
    %374 = vsyncpa [#allocation4], 1
    %375 = vsyncpa [#allocation6], 1
    %376 = vsyncpa [#allocation9], 1

</llo_original>
